<compile_context>
chip_gen: v7x
topology: tpu7x:2x2x1
jax: 0.10.0
libtpu: 0.0.40
codegen_flags: <defaults>
</compile_context>

<pallas_src>
import jax
import jax.numpy as jnp
from jax.experimental import pallas as pl
from jax.experimental.pallas import tpu as pltpu


_LANE_TILE = 512    # block lane width (multiple of 128)
_ROW_TILE = 1024    # block rows -> (1024, 512) f32 = 2 MiB per buffer


def _eltwise_kernel(coef_ref, x_ref, o_ref):
    """out = z + x * y on one interleaved (TR, C) tile (even lane = feature 0)."""
    x = x_ref[...]                                   # (TR, C) f32
    c = x.shape[-1]

    coef = coef_ref[...]                             # (4, C): a1, b1, a2, b2 rows
    a1 = coef[0:1, :]
    b1 = coef[1:2, :]
    a2 = coef[2:3, :]
    b2 = coef[3:4, :]

    # Partner-lane value x[j ^ 1]: exactly one of the two single-step rotations
    # lands on the other lane of the same (f0, f1) pair.  Select it by rotating
    # a pair-index iota with the same shift (direction-convention agnostic).
    pair_id = jax.lax.broadcasted_iota(jnp.int32, x.shape, 1) >> 1
    r_a = pltpu.roll(x, shift=1, axis=1)
    r_b = pltpu.roll(x, shift=c - 1, axis=1)
    pair_a = pltpu.roll(pair_id, shift=1, axis=1)
    x_pair = jnp.where(pair_a == pair_id, r_a, r_b)

    y = a1 * x + b1 * x_pair                         # squeeze1(x), interleaved
    z = a2 * x + b2 * x_pair                         # squeeze2(x), interleaved
    o_ref[...] = z + x * y


def _pick_tiling(total):
    """Choose (rows, lane_width, row_tile) for a flat slab of `total` f32."""
    c = _LANE_TILE
    while c > 128 and total < 8 * c:                 # tiny inputs: narrower slab
        c //= 2
    rows = pl.cdiv(total, c)
    rows = pl.cdiv(rows, 8) * 8                      # f32 min sublane tile (8, 128)
    tr = min(_ROW_TILE, rows)
    rows = pl.cdiv(rows, tr) * tr                    # exact grid, no ragged block
    return rows, c, tr


@jax.jit
def eltwise_forward(x, w1, w2):
    """z + x * y with y = x @ w1.T, z = x @ w2.T (trailing dim of x must be 2)."""
    orig_shape = x.shape
    assert orig_shape[-1] == 2, "feature dim must be 2 (nn.Linear(2, 2))"
    total = x.size
    rows, c, tr = _pick_tiling(total)

    flat = x.reshape(-1)                             # (f0, f1) pairs stay adjacent
    pad = rows * c - total
    if pad:
        flat = jnp.pad(flat, (0, pad))
    x2d = flat.reshape(rows, c)                      # lane-dense slab

    # Per-lane coefficients for the interleaved layout:
    #   even lane j (feature 0): lin = W[0,0]*x[j] + W[0,1]*x[j+1]
    #   odd  lane j (feature 1): lin = W[1,1]*x[j] + W[1,0]*x[j-1]
    even = (jnp.arange(c) % 2) == 0
    a1 = jnp.where(even, w1[0, 0], w1[1, 1])
    b1 = jnp.where(even, w1[0, 1], w1[1, 0])
    a2 = jnp.where(even, w2[0, 0], w2[1, 1])
    b2 = jnp.where(even, w2[0, 1], w2[1, 0])
    coef = jnp.stack([a1, b1, a2, b2]).astype(x.dtype)   # (4, C)

    out2d = pl.pallas_call(
        _eltwise_kernel,
        out_shape=jax.ShapeDtypeStruct((rows, c), x.dtype),
        grid=(rows // tr,),
        in_specs=[
            pl.BlockSpec((4, c), lambda i: (0, 0)),      # coef: tiny, VMEM-resident
            pl.BlockSpec((tr, c), lambda i: (i, 0)),     # x tile
        ],
        out_specs=pl.BlockSpec((tr, c), lambda i: (i, 0)),
        compiler_params=pltpu.CompilerParams(
            dimension_semantics=("parallel",),           # use both TCs on v7x
            vmem_limit_bytes=32 * 1024 * 1024,           # safe on v5e/v6e/v7x
        ),
        input_output_aliases={1: 0},                     # reuse x2d's HBM buffer
    )(coef, x2d)

    out_flat = out2d.reshape(-1)
    if pad:
        out_flat = out_flat[:total]
    return out_flat.reshape(orig_shape)


if __name__ == "__main__":
    key = jax.random.PRNGKey(0)
    kx, k1, k2 = jax.random.split(key, 3)
    # Small shape consistent with the module: nn.Linear(2, 2) acts on a
    # trailing feature dim of size 2.
    x = jax.random.normal(kx, (2, 4, 16, 2), dtype=jnp.float32)
    w1 = jax.random.normal(k1, (2, 2), dtype=jnp.float32)
    w2 = jax.random.normal(k2, (2, 2), dtype=jnp.float32)

    # Pure-JAX reference of the PyTorch forward:
    #   y = squeeze1(x); z = squeeze2(x); return z + x * y
    y_ref = jnp.einsum("...i,oi->...o", x, w1)
    z_ref = jnp.einsum("...i,oi->...o", x, w2)
    ref = z_ref + x * y_ref

    out = eltwise_forward(x, w1, w2)
    out = jax.block_until_ready(out)

    assert out.shape == x.shape, out.shape
    assert jnp.allclose(out, ref, atol=1e-5, rtol=1e-5), "mismatch vs reference"
    print("KERNEL_OK")
</pallas_src>

<mosaic_0001>
module attributes {stable_mosaic.version = 11 : i64} {
  func.func @_eltwise_kernel(%arg0: i32, %arg1: memref<4x128xf32, #tpu.memory_space<vmem>>, %arg2: memref<8x128xf32, #tpu.memory_space<vmem>>, %arg3: memref<8x128xf32, #tpu.memory_space<vmem>>) attributes {dimension_semantics = [#tpu.dimension_semantics<parallel>], iteration_bounds = array<i64: 1>, scalar_prefetch = 0 : i64, scratch_operands = 0 : i64, tpu.core_type = #tpu.core_type<tc>, window_params = [{pipeline_mode = #tpu.pipeline_mode<synchronous>, transform_indices = @transform_0, window_bounds = array<i64: 4, 128>}, {transform_indices = @transform_1, window_bounds = array<i64: 8, 128>}, {transform_indices = @transform_2, window_bounds = array<i64: 8, 128>}]} {
    %c0 = arith.constant 0 : index
    %c0_0 = arith.constant 0 : index
    %0 = vector.load %arg2[%c0, %c0_0] : memref<8x128xf32, #tpu.memory_space<vmem>>, vector<8x128xf32>
    %c0_1 = arith.constant 0 : index
    %c0_2 = arith.constant 0 : index
    %1 = vector.load %arg1[%c0_1, %c0_2] : memref<4x128xf32, #tpu.memory_space<vmem>>, vector<4x128xf32>
    %2 = vector.extract_strided_slice %1 {offsets = [0, 0], sizes = [1, 128], strides = [1, 1]} : vector<4x128xf32> to vector<1x128xf32>
    %3 = vector.extract_strided_slice %1 {offsets = [1, 0], sizes = [1, 128], strides = [1, 1]} : vector<4x128xf32> to vector<1x128xf32>
    %4 = vector.extract_strided_slice %1 {offsets = [2, 0], sizes = [1, 128], strides = [1, 1]} : vector<4x128xf32> to vector<1x128xf32>
    %5 = vector.extract_strided_slice %1 {offsets = [3, 0], sizes = [1, 128], strides = [1, 1]} : vector<4x128xf32> to vector<1x128xf32>
    %6 = tpu.iota {dimensions = array<i32: 1>} : vector<8x128xi32>
    %c1_i32 = arith.constant 1 : i32
    %7 = vector.broadcast %c1_i32 : i32 to vector<8x128xi32>
    %8 = arith.shrsi %6, %7 : vector<8x128xi32>
    %c1_i32_3 = arith.constant 1 : i32
    %9 = tpu.dynamic_rotate %0 by %c1_i32_3 dim 1 : vector<8x128xf32>, i32 -> vector<8x128xf32>
    %c127_i32 = arith.constant 127 : i32
    %10 = tpu.dynamic_rotate %0 by %c127_i32 dim 1 : vector<8x128xf32>, i32 -> vector<8x128xf32>
    %c1_i32_4 = arith.constant 1 : i32
    %11 = tpu.dynamic_rotate %8 by %c1_i32_4 dim 1 : vector<8x128xi32>, i32 -> vector<8x128xi32>
    %12 = arith.cmpi eq, %11, %8 : vector<8x128xi32>
    %13 = arith.select %12, %9, %10 : vector<8x128xi1>, vector<8x128xf32>
    %14 = vector.broadcast %2 : vector<1x128xf32> to vector<8x128xf32>
    %15 = arith.mulf %14, %0 : vector<8x128xf32>
    %16 = vector.broadcast %3 : vector<1x128xf32> to vector<8x128xf32>
    %17 = arith.mulf %16, %13 : vector<8x128xf32>
    %18 = arith.addf %15, %17 : vector<8x128xf32>
    %19 = vector.broadcast %4 : vector<1x128xf32> to vector<8x128xf32>
    %20 = arith.mulf %19, %0 : vector<8x128xf32>
    %21 = vector.broadcast %5 : vector<1x128xf32> to vector<8x128xf32>
    %22 = arith.mulf %21, %13 : vector<8x128xf32>
    %23 = arith.addf %20, %22 : vector<8x128xf32>
    %24 = arith.mulf %0, %18 : vector<8x128xf32>
    %25 = arith.addf %23, %24 : vector<8x128xf32>
    %c0_5 = arith.constant 0 : index
    %c0_6 = arith.constant 0 : index
    %26 = vector.load %arg3[%c0_5, %c0_6] : memref<8x128xf32, #tpu.memory_space<vmem>>, vector<8x128xf32>
    tpu.vector_store %arg3[%c0_5, %c0_6], %25 {strides = array<i32>} : memref<8x128xf32, #tpu.memory_space<vmem>>, vector<8x128xf32>,
    return
  }
  func.func @transform_0(%arg0: i32) -> (i32, i32) {
    %c0_i32 = arith.constant 0 : i32
    %c0_i32_0 = arith.constant 0 : i32
    %c0_i32_1 = arith.constant 0 : i32
    return %c0_i32, %c0_i32_0 : i32, i32
  }
  func.func @transform_1(%arg0: i32) -> (i32, i32) {
    %c0_i32 = arith.constant 0 : i32
    %c0_i32_0 = arith.constant 0 : i32
    return %arg0, %c0_i32 : i32, i32
  }
  func.func @transform_2(%arg0: i32) -> (i32, i32) {
    %c0_i32 = arith.constant 0 : i32
    %c0_i32_0 = arith.constant 0 : i32
    return %arg0, %c0_i32 : i32, i32
  }
}

</mosaic_0001>

<llo_original>
// kernel: eltwise_forward.1
$region0: #{eltwise_forward.1}
  #allocation0 [shape = 'u32[]', space=smem, size = 0x4, offset = 0x4, fixed_abs, tag = 'smem constant byte address 0x4 - core index']
  #allocation1 [shape = 'u32[144,128]{1,0:T(1,128)}', space=vmem, size = 0x12000, scoped, tag = 'internal scratch']
  %s0 = inlined_call_operand.vmem [shape: f32[4,128], index: 0, kind: input, shape index: {}]
  %s1 = inlined_call_operand.vmem [shape: f32[8,128], index: 1, kind: input, shape index: {}, may-alias: {1,2}]
  %s2 = inlined_call_operand.vmem [shape: f32[8,128], index: 2, kind: output, shape index: {}, may-alias: {1,2}]
  %s3 = sld [smem:[#allocation0]]
  $region18: #{eltwise_forward.1} parent=0
    _
  %s5 = ssub.s32 1, %s3
  %s6 = scalar_select 0, %s5, %s3
  // Predicated region
  $region2: #{eltwise_forward.1} parent=0 // pred_check
    _
  $region3: #{eltwise_forward.1} parent=0 // pred_check_branch
    %8 = sbr.rel (0) target = $region5
  $region4: #{eltwise_forward.1} parent=0 // pred_region
    _
  $region5: #{eltwise_forward.1} parent=0 // pred_fallthru
    _
  // Predicated region
  $region6: #{eltwise_forward.1} parent=0 // pred_check
    _
  $region7: #{eltwise_forward.1} parent=0 // pred_check_branch
    %10 = sbr.rel (0) target = $region9
  $region8: #{eltwise_forward.1} parent=0 // pred_region
    _
  $region9: #{eltwise_forward.1} parent=0 // pred_fallthru
    _
  %v11 = vld [vmem:[%s1] sm:$0xff]
  %v12 = vld [vmem:[%s0] sm:$0xf]
  %v13 = vlaneseq
  %v14 = vand.u32 %v13, 127
  %v15 = vshra.s32 %v14, 1
  %16 = vrot.lane.b32.xlu0 %v11, 1
  %v17 = vpop.permute.xlu0 %16
  %18 = vrot.lane.b32.xlu0 %v11, 127
  %v19 = vpop.permute.xlu0 %18
  %20 = vrot.lane.b32.xlu0 %v15, 1
  %v21 = vpop.permute.xlu0 %20
  %vm22 = vcmp.eq.s32.totalorder %v21, %v15
  %v23 = vsel %vm22, %v17, %v19
  %v24 = vlaneseq
  %v25 = vshrl.u32 %v24, 7
  %v26 = vsub.s32 0, %v25
  %v27 = vrot.slane %v12, %v26
  %v28 = vmul.f32 %v27, %v11
  %v29 = vlaneseq
  %v30 = vshrl.u32 %v29, 7
  %v31 = vsub.s32 1, %v30
  %v32 = vrot.slane %v12, %v31
  %v33 = vmul.f32 %v32, %v23
  %v34 = vadd.f32 %v28, %v33
  %v35 = vlaneseq
  %v36 = vshrl.u32 %v35, 7
  %v37 = vsub.s32 2, %v36
  %v38 = vrot.slane %v12, %v37
  %v39 = vmul.f32 %v38, %v11
  %v40 = vlaneseq
  %v41 = vshrl.u32 %v40, 7
  %v42 = vsub.s32 3, %v41
  %v43 = vrot.slane %v12, %v42
  %v44 = vmul.f32 %v43, %v23
  %v45 = vadd.f32 %v39, %v44
  %v46 = vmul.f32 %v11, %v34
  %v47 = vadd.f32 %v45, %v46
  %48 = vst [vmem:[%s2] sm:$0xff] %v47
  // Predicated region
  $region10: #{eltwise_forward.1} parent=0 // pred_check
    _
  $region11: #{eltwise_forward.1} parent=0 // pred_check_branch
    %50 = sbr.rel (0) target = $region13
  $region12: #{eltwise_forward.1} parent=0 // pred_region
    _
  $region13: #{eltwise_forward.1} parent=0 // pred_fallthru
    _
  // Predicated region
  $region14: #{eltwise_forward.1} parent=0 // pred_check
    _
  $region15: #{eltwise_forward.1} parent=0 // pred_check_branch
    %52 = sbr.rel (0) target = $region17
  $region16: #{eltwise_forward.1} parent=0 // pred_region
    _
  $region17: #{eltwise_forward.1} parent=0 // pred_fallthru
    _

</llo_original>
